<compile_context>
chip_gen: v7x
topology: tpu7x:2x2x1
jax: 0.10.0
libtpu: 0.0.40
codegen_flags: <defaults>
</compile_context>

<pallas_src>
import functools

import jax
import jax.numpy as jnp
from jax.experimental import pallas as pl
from jax.experimental.pallas import tpu as pltpu


# ----------------------------------------------------------------------------- kernel
def _mean_pool_kernel(x_ref, m_ref, den_ref, o_ref, acc_ref, *, precision):
    # x_ref:   (B_TILE, S_TILE, H_TILE)  native dtype
    # m_ref:   (B_TILE, S_TILE)          float32 mask
    # den_ref: (B_TILE, 1)               float32, precomputed sum_s(mask)
    # o_ref:   (B_TILE, H_TILE)
    # acc_ref: (B_TILE, H_TILE)          f32 scratch (persists across the S axis)
    s = pl.program_id(2)

    @pl.when(s == 0)
    def _init():
        acc_ref[...] = jnp.zeros_like(acc_ref)

    x = x_ref[...]                             # (BT, ST, HT)
    m = m_ref[...].astype(x.dtype)             # (BT, ST); mask is 0/1 -> cast is exact

    # Masked partial sum over this sequence tile as a batched (1 x ST) @ (ST x HT)
    # MXU matmul with f32 accumulation (same einsum pattern as the flash kernels).
    part = jnp.einsum(
        "bqs,bsh->bqh",
        m[:, None, :],
        x,
        preferred_element_type=jnp.float32,
        precision=precision,
    )                                          # (BT, 1, HT) f32
    acc_ref[...] += part.reshape(acc_ref.shape)

    @pl.when(s == pl.num_programs(2) - 1)
    def _finalize():
        o_ref[...] = (acc_ref[...] / (den_ref[...] + 1e-8)).astype(o_ref.dtype)


# ----------------------------------------------------------------------------- tiling
def _round_up(n: int, m: int) -> int:
    return (n + m - 1) // m * m


def _vmem_capacity_bytes() -> int:
    """Physical VMEM per TensorCore; conservative 64 MiB (v7x) fallback."""
    try:
        info = pltpu.get_tpu_info()
        cap = getattr(info, "vmem_capacity_bytes", None)
        if cap:
            return int(cap)
    except Exception:
        pass
    return 64 * 1024 * 1024


def _choose_h_tile(H: int, n_b_tiles: int) -> int:
    if H % 128 != 0:
        # Full-H blocks: per-batch rows are contiguous in HBM, so the DMA runs at
        # full bandwidth; lane-sparsity only costs VMEM/vreg slack (mem-bound op).
        return H
    h_tile = H
    if H > 2048:
        for c in (2048, 1024, 512, 256, 128):
            if H % c == 0:
                h_tile = c
                break
    # v7x has 2 TensorCores: make sure the "parallel" grid axes have >= 2 steps.
    if n_b_tiles == 1 and h_tile == H and H >= 256 and (H // 2) % 128 == 0:
        h_tile = H // 2
    return h_tile


# ----------------------------------------------------------------------------- wrapper
def mean_pool_head(hidden_states: jax.Array, attention_mask: jax.Array) -> jax.Array:
    """hidden_states: [B, S, H], attention_mask: [B, S] -> [B, H]."""
    B, S, H = hidden_states.shape
    assert attention_mask.shape == (B, S)

    x = hidden_states
    mask = attention_mask.astype(jnp.float32)
    itemsize = jnp.dtype(x.dtype).itemsize

    vmem_cap = _vmem_capacity_bytes()
    # x-block budget: ~VMEM/8 (double-buffered -> ~VMEM/4); 16 MiB on v5e/v6e, 8 MiB on v7x.
    block_budget = max(2 * 1024 * 1024, vmem_cap // 8)
    vmem_limit = int(min(vmem_cap * 3 // 4, 96 * 1024 * 1024))

    # --- batch tile (sublane rule: multiple of 8, or equal to the full batch) ---
    if B <= 8 or (B < 16 and B % 8 != 0):
        b_tile, Bp = B, B
    elif B % 8 == 0:
        b_tile, Bp = 8, B
    else:
        b_tile, Bp = 8, _round_up(B, 8)        # padded rows are all-zero, sliced off
    n_b = Bp // b_tile

    # --- hidden tile ---
    h_tile = _choose_h_tile(H, n_b)
    n_h = H // h_tile

    # Pathological guard: even the minimum S tile would not fit -> per-batch steps.
    if b_tile > 1 and b_tile * 8 * h_tile * itemsize > block_budget:
        b_tile, Bp = 1, B
        n_b = B

    # --- sequence tile ---
    row_bytes = b_tile * h_tile * itemsize
    s_cap = max(8, block_budget // row_bytes)
    if S <= s_cap:
        s_tile, Sp = S, S                      # single S step, block dim == full dim
    else:
        s_cap_128 = max(128, (s_cap // 128) * 128)
        s_tile = 0
        for cand in range(s_cap_128, 127, -128):   # prefer an exact 128-multiple divisor
            if S % cand == 0:
                s_tile = cand
                break
        if s_tile == 0:
            s_tile = s_cap_128                 # rare fallback: pad S (one extra copy of x)
        Sp = _round_up(S, s_tile)
    n_s = Sp // s_tile

    # --- zero-pad only when actually required (padded mask rows contribute nothing) ---
    if Bp != B or Sp != S:
        x = jnp.pad(x, ((0, Bp - B), (0, Sp - S), (0, 0)))
        mask = jnp.pad(mask, ((0, Bp - B), (0, Sp - S)))

    # Denominator hoisted out of the kernel: sum_s(mask), shape (Bp, 1), f32.
    den = jnp.sum(mask, axis=1, keepdims=True)

    precision = (
        jax.lax.Precision.HIGHEST
        if jnp.dtype(x.dtype) == jnp.float32
        else jax.lax.Precision.DEFAULT
    )
    kernel = functools.partial(_mean_pool_kernel, precision=precision)

    cost = pl.CostEstimate(
        flops=2 * Bp * Sp * H,
        transcendentals=0,
        bytes_accessed=Bp * Sp * H * itemsize + Bp * Sp * 4 + Bp * H * itemsize,
    )

    out = pl.pallas_call(
        kernel,
        out_shape=jax.ShapeDtypeStruct((Bp, H), x.dtype),
        grid_spec=pltpu.PrefetchScalarGridSpec(
            num_scalar_prefetch=0,
            grid=(n_b, n_h, n_s),              # reduction (S) axis last
            in_specs=[
                # If a profile ever shows DMA gaps, add pipeline_mode=pl.Buffered(3) here.
                pl.BlockSpec((b_tile, s_tile, h_tile), lambda b, h, s: (b, s, h)),
                pl.BlockSpec((b_tile, s_tile), lambda b, h, s: (b, s)),
                pl.BlockSpec((b_tile, 1), lambda b, h, s: (b, 0)),
            ],
            out_specs=pl.BlockSpec((b_tile, h_tile), lambda b, h, s: (b, h)),
            scratch_shapes=[pltpu.VMEM((b_tile, h_tile), jnp.float32)],
        ),
        compiler_params=pltpu.CompilerParams(
            dimension_semantics=("parallel", "parallel", "arbitrary"),
            vmem_limit_bytes=vmem_limit,
        ),
        cost_estimate=cost,
    )(x, mask, den)

    return out[:B] if Bp != B else out


# ----------------------------------------------------------------------------- test
def _reference(hidden_states, attention_mask):
    mask = attention_mask.astype(jnp.float32)[..., None]
    num = jnp.sum(hidden_states.astype(jnp.float32) * mask, axis=1)
    den = jnp.sum(mask, axis=1) + 1e-8
    return (num / den).astype(hidden_states.dtype)


if __name__ == "__main__":
    key = jax.random.PRNGKey(0)

    # Case 1: the module's nominal small shape (single grid step).
    k1, k2 = jax.random.split(key)
    B, S, H = 2, 8, 32
    hidden_states = jax.random.normal(k1, (B, S, H), dtype=jnp.float32)
    attention_mask = (jax.random.uniform(k2, (B, S)) > 0.3).astype(jnp.float32)

    out = jax.block_until_ready(mean_pool_head(hidden_states, attention_mask))
    ref = _reference(hidden_states, attention_mask)
    assert out.shape == (B, H)
    assert jnp.allclose(out, ref, atol=1e-5, rtol=1e-5)

    # Case 2: exercises the hidden-dim split (2 parallel H tiles) and odd batch tile.
    k3, k4 = jax.random.split(k2)
    B2, S2, H2 = 3, 16, 256
    hs2 = jax.random.normal(k3, (B2, S2, H2), dtype=jnp.float32)
    am2 = (jax.random.uniform(k4, (B2, S2)) > 0.5).astype(jnp.float32)

    out2 = jax.block_until_ready(mean_pool_head(hs2, am2))
    ref2 = _reference(hs2, am2)
    assert out2.shape == (B2, H2)
    assert jnp.allclose(out2, ref2, atol=1e-5, rtol=1e-5)

    print("KERNEL_OK")
</pallas_src>

<mosaic_0001>
module attributes {stable_mosaic.version = 11 : i64} {
  func.func @_mean_pool_kernel(%arg0: i32, %arg1: i32, %arg2: i32, %arg3: memref<2x8x32xf32, #tpu.memory_space<vmem>>, %arg4: memref<2x8xf32, #tpu.memory_space<vmem>>, %arg5: memref<2x1xf32, #tpu.memory_space<vmem>>, %arg6: memref<2x32xf32, #tpu.memory_space<vmem>>, %arg7: memref<2x32xf32, #tpu.memory_space<vmem>>) attributes {dimension_semantics = [#tpu.dimension_semantics<parallel>, #tpu.dimension_semantics<parallel>, #tpu.dimension_semantics<arbitrary>], iteration_bounds = array<i64: 1, 1, 1>, scalar_prefetch = 0 : i64, scratch_operands = 1 : i64, tpu.core_type = #tpu.core_type<tc>, window_params = [{transform_indices = @transform_0, window_bounds = array<i64: 2, 8, 32>}, {transform_indices = @transform_1, window_bounds = array<i64: 2, 8>}, {transform_indices = @transform_2, window_bounds = array<i64: 2, 1>}, {transform_indices = @transform_3, window_bounds = array<i64: 2, 32>}]} {
    %c0_i32 = arith.constant 0 : i32
    %0 = arith.cmpi eq, %arg2, %c0_i32 : i32
    %1 = arith.extui %0 : i1 to i32
    %c0_i32_0 = arith.constant 0 : i32
    %2 = arith.cmpi ne, %1, %c0_i32_0 : i32
    scf.if %2 {
      %cst_11 = arith.constant 0.000000e+00 : f32
      %14 = vector.broadcast %cst_11 : f32 to vector<2x32xf32>
      %c0_12 = arith.constant 0 : index
      %c0_13 = arith.constant 0 : index
      %15 = vector.load %arg7[%c0_12, %c0_13] : memref<2x32xf32, #tpu.memory_space<vmem>>, vector<2x32xf32>
      tpu.vector_store %arg7[%c0_12, %c0_13], %14 {strides = array<i32>} : memref<2x32xf32, #tpu.memory_space<vmem>>, vector<2x32xf32>,
    } else {
    }
    %c0 = arith.constant 0 : index
    %c0_1 = arith.constant 0 : index
    %c0_2 = arith.constant 0 : index
    %3 = vector.load %arg3[%c0, %c0_1, %c0_2] : memref<2x8x32xf32, #tpu.memory_space<vmem>>, vector<2x8x32xf32>
    %c0_3 = arith.constant 0 : index
    %c0_4 = arith.constant 0 : index
    %4 = vector.load %arg4[%c0_3, %c0_4] : memref<2x8xf32, #tpu.memory_space<vmem>>, vector<2x8xf32>
    %5 = vector.shape_cast %4 : vector<2x8xf32> to vector<2x1x8xf32>
    "tpu.trace_start"() <{level = 10 : i32, message = "bqs,bsh->bqh"}> : () -> ()
    %cst = arith.constant dense<0.000000e+00> : vector<2x1x32xf32>
    %6 = tpu.matmul %5, %3, %cst {dimension_numbers = #tpu.dot_dimension_numbers<[2], [1], [1], [2], [0, 0, 0, 1, 1, 2], [0], [0]>, precision = #tpu.contract_precision<fp32>} : vector<2x1x8xf32>, vector<2x8x32xf32>, vector<2x1x32xf32> -> vector<2x1x32xf32>
    "tpu.trace_stop"() : () -> ()
    %c0_5 = arith.constant 0 : index
    %c0_6 = arith.constant 0 : index
    %7 = vector.load %arg7[%c0_5, %c0_6] : memref<2x32xf32, #tpu.memory_space<vmem>>, vector<2x32xf32>
    %8 = vector.shape_cast %6 : vector<2x1x32xf32> to vector<2x32xf32>
    %9 = arith.addf %7, %8 : vector<2x32xf32>
    %c0_7 = arith.constant 0 : index
    %c0_8 = arith.constant 0 : index
    %10 = vector.load %arg7[%c0_7, %c0_8] : memref<2x32xf32, #tpu.memory_space<vmem>>, vector<2x32xf32>
    tpu.vector_store %arg7[%c0_7, %c0_8], %9 {strides = array<i32>} : memref<2x32xf32, #tpu.memory_space<vmem>>, vector<2x32xf32>,
    %c0_i32_9 = arith.constant 0 : i32
    %11 = arith.cmpi eq, %arg2, %c0_i32_9 : i32
    %12 = arith.extui %11 : i1 to i32
    %c0_i32_10 = arith.constant 0 : i32
    %13 = arith.cmpi ne, %12, %c0_i32_10 : i32
    scf.if %13 {
      %c0_11 = arith.constant 0 : index
      %c0_12 = arith.constant 0 : index
      %14 = vector.load %arg7[%c0_11, %c0_12] : memref<2x32xf32, #tpu.memory_space<vmem>>, vector<2x32xf32>
      %c0_13 = arith.constant 0 : index
      %c0_14 = arith.constant 0 : index
      %15 = vector.load %arg5[%c0_13, %c0_14] : memref<2x1xf32, #tpu.memory_space<vmem>>, vector<2x1xf32>
      %cst_15 = arith.constant 9.99999993E-9 : f32
      %16 = vector.broadcast %cst_15 : f32 to vector<2x1xf32>
      %17 = arith.addf %15, %16 : vector<2x1xf32>
      %18 = vector.broadcast %17 : vector<2x1xf32> to vector<2x32xf32>
      %19 = arith.divf %14, %18 : vector<2x32xf32>
      %c0_16 = arith.constant 0 : index
      %c0_17 = arith.constant 0 : index
      %20 = vector.load %arg6[%c0_16, %c0_17] : memref<2x32xf32, #tpu.memory_space<vmem>>, vector<2x32xf32>
      tpu.vector_store %arg6[%c0_16, %c0_17], %19 {strides = array<i32>} : memref<2x32xf32, #tpu.memory_space<vmem>>, vector<2x32xf32>,
    } else {
    }
    return
  }
  func.func @transform_0(%arg0: i32, %arg1: i32, %arg2: i32) -> (i32, i32, i32) {
    %c0_i32 = arith.constant 0 : i32
    return %arg0, %arg2, %arg1 : i32, i32, i32
  }
  func.func @transform_1(%arg0: i32, %arg1: i32, %arg2: i32) -> (i32, i32) {
    %c0_i32 = arith.constant 0 : i32
    return %arg0, %arg2 : i32, i32
  }
  func.func @transform_2(%arg0: i32, %arg1: i32, %arg2: i32) -> (i32, i32) {
    %c0_i32 = arith.constant 0 : i32
    %c0_i32_0 = arith.constant 0 : i32
    return %arg0, %c0_i32 : i32, i32
  }
  func.func @transform_3(%arg0: i32, %arg1: i32, %arg2: i32) -> (i32, i32) {
    %c0_i32 = arith.constant 0 : i32
    return %arg0, %arg1 : i32, i32
  }
}

</mosaic_0001>

<llo_original>
// kernel: tpu_custom_call.1
$region0: #{tpu_custom_call.1}
  #allocation0 [shape = 'u32[]', space=smem, size = 0x4, offset = 0x4, fixed_abs, tag = 'smem constant byte address 0x4 - core index']
  #allocation1 [shape = 'u32[144,128]{1,0:T(1,128)}', space=vmem, size = 0x12000, scoped, tag = 'internal scratch']
  #allocation2 [shape = 'f32[2,32]{1,0:T(2,128)}', space=vmem, size = 0x400, scoped, tag = 'scratch operand']
  %s0 = inlined_call_operand.hbm [shape: f32[2,8,32], index: 0, kind: input, shape index: {}]
  %s1 = inlined_call_operand.vmem [shape: f32[2,8], index: 1, kind: input, shape index: {}]
  %s2 = inlined_call_operand.vmem [shape: f32[2,1], index: 2, kind: input, shape index: {}]
  %s3 = inlined_call_operand.hbm [shape: f32[2,32], index: 3, kind: output, shape index: {}]
  %s4 = sld [smem:[#allocation0]]
  $region34: #{tpu_custom_call.1} parent=0
    _
  %s6 = ssub.s32 1, %s4
  %s7 = scalar_select 0, %s6, %s4
  $region1: #{tpu_custom_call.1} parent=0
    #allocation3 [shape = 'u8[8192]{0}', space=vmem, size = 0x2000, scoped, tag = 'input window, operand 0, single buffered']
    #allocation4 [shape = 's32[1]{0}', space=sflag, size = 0x4, scoped, tag = 'scoped memory for tpu_custom_call.1']
    #allocation5 [shape = 's32[1]{0}', space=sflag, size = 0x4, scoped, tag = 'scoped memory for tpu_custom_call.1']
    #allocation6 [shape = 'u8[1024]{0}', space=vmem, size = 0x400, scoped, tag = 'output window, operand 0, single buffered']
    %8 = vsyncpa [#allocation4], 0
    %9 = vsyncpa [#allocation5], 0
    // Predicated region
    $region2: #{tpu_custom_call.1} parent=1 // pred_check
      _
    $region3: #{tpu_custom_call.1} parent=1 // pred_check_branch
      %11 = sbr.rel (0) target = $region5
    $region4: #{tpu_custom_call.1} parent=1 // pred_region
      %s13 = ssub.s32 256, 256
      %14 = vsyncadd [#allocation4], %s13
      %s15 = sshll.u32 [#allocation3], 4
      %s16 = int_to_ptr.vmem [resolvable:$true] %s15
      %21 = dma.hbm_to_vmem [thread:$0]  %s0, 256, %s16, [#allocation4], 128, 128, 8
    $region5: #{tpu_custom_call.1} parent=1 // pred_fallthru
      _
    // Predicated region
    $region6: #{tpu_custom_call.1} parent=1 // pred_check
      _
    $region7: #{tpu_custom_call.1} parent=1 // pred_check_branch
      %23 = sbr.rel (0) target = $region9
    $region8: #{tpu_custom_call.1} parent=1 // pred_region
      _
    $region9: #{tpu_custom_call.1} parent=1 // pred_fallthru
      _
    // Predicated region
    $region10: #{tpu_custom_call.1} parent=1 // pred_check
      _
    $region11: #{tpu_custom_call.1} parent=1 // pred_check_branch
      %25 = sbr.rel (0) target = $region13
    $region12: #{tpu_custom_call.1} parent=1 // pred_region
      _
    $region13: #{tpu_custom_call.1} parent=1 // pred_fallthru
      _
    // Predicated region
    $region14: #{tpu_custom_call.1} parent=1 // pred_check
      _
    $region15: #{tpu_custom_call.1} parent=1 // pred_check_branch
      %27 = sbr.rel (0) target = $region17
    $region16: #{tpu_custom_call.1} parent=1 // pred_region
      %28 = dma.done [#allocation4], 256
    $region17: #{tpu_custom_call.1} parent=1 // pred_fallthru
      _
    %p29 = scmp.eq.s32.totalorder 0, 0
    // Predicated region
    $region18: #{tpu_custom_call.1} parent=1 // pred_check
      %p30 = pneg %p29
    $region19: #{tpu_custom_call.1} parent=1 // pred_check_branch
      %32 = sbr.rel (%p30) target = $region21
    $region20: #{tpu_custom_call.1} parent=1 // pred_region
      %vm33 = vcmask 254976
      %34 = vst.msk [vmem:[#allocation2] sm:$0x3] %vm33, 0.0
    $region21: #{tpu_custom_call.1} parent=1 // pred_fallthru
      _
    %v35 = vld [vmem:[#allocation3] sm:$0xff]
    %v36 = vld [vmem:[#allocation3 + $0x8] sm:$0xff]
    %v37 = vld [vmem:[%s1] sm:$0x3]
    %v40 = vunpack.c.l.s4 1966171168
    %v41 = vunpack.c.0.s8 %v40
    %v42 = vlaneseq
    %v43 = vshrl.u32 %v42, 7
    %v44 = vsub.s32 %v41, %v43
    %v45 = vrot.slane %v37, %v44
    %v46 = vcombine.high %v45, %v45
    %v48 = vunpack.c.l.s4 1966171168
    %v49 = vunpack.c.0.s8 %v48
    %v50 = vlaneseq
    %v51 = vshrl.u32 %v50, 7
    %v52 = vsub.s32 %v49, %v51
    %v53 = vrot.slane %v45, %v52
    %v55 = vunpack.c.l.s4 1966171168
    %v56 = vunpack.c.0.s8 %v55
    %v57 = vlaneseq
    %v58 = vshrl.u32 %v57, 7
    %v59 = vsub.s32 %v56, %v58
    %v60 = vrot.slane %v46, %v59
    %vm61 = vcmask 64512
    %v62 = vsel %vm61, %v53, 0
    %64 = vmatprep.subr.mxu0 0.0
    %v65 = vand.u32 %v35, 4294901760
    %66 = vmatpush1.msra.mxu0 %v65
    %67 = vmatprep.subr.mxu0 0.0
    %68 = vmatpush1.msra.mxu0 0.0
    %69 = vmatprep.subr.mxu0 0.0
    %70 = vmatpush1.msra.mxu0 0.0
    %71 = vmatprep.subr.mxu0 0.0
    %72 = vmatpush1.msra.mxu0 0.0
    %73 = vmatprep.subr.mxu0 0.0
    %74 = vmatpush1.msra.mxu0 0.0
    %75 = vmatprep.subr.mxu0 0.0
    %76 = vmatpush1.msra.mxu0 0.0
    %77 = vmatprep.subr.mxu0 0.0
    %78 = vmatpush1.msra.mxu0 0.0
    %79 = vmatprep.subr.mxu0 0.0
    %80 = vmatpush1.msra.mxu0 0.0
    %81 = vmatprep.subr.mxu0 0.0
    %82 = vmatpush1.msra.mxu0 0.0
    %83 = vmatprep.subr.mxu0 0.0
    %84 = vmatpush1.msra.mxu0 0.0
    %85 = vmatprep.subr.mxu0 0.0
    %86 = vmatpush1.msra.mxu0 0.0
    %87 = vmatprep.subr.mxu0 0.0
    %88 = vmatpush1.msra.mxu0 0.0
    %89 = vmatprep.subr.mxu0 0.0
    %90 = vmatpush1.msra.mxu0 0.0
    %91 = vmatprep.subr.mxu0 0.0
    %92 = vmatpush1.msra.mxu0 0.0
    %93 = vmatprep.subr.mxu0 0.0
    %94 = vmatpush1.msra.mxu0 0.0
    %95 = vmatprep.subr.mxu0 0.0
    %96 = vmatpush1.msra.mxu0 0.0
    %97 = vmatprep.subr.mxu0 0.0
    %98 = vmatpush1.msra.mxu0 0.0
    %99 = vmatprep.subr.mxu0 0.0
    %100 = vmatpush1.msra.mxu0 0.0
    %101 = vmatprep.subr.mxu0 0.0
    %102 = vmatpush1.msra.mxu0 0.0
    %103 = vmatprep.subr.mxu0 0.0
    %104 = vmatpush1.msra.mxu0 0.0
    %105 = vmatprep.subr.mxu0 0.0
    %106 = vmatpush1.msra.mxu0 0.0
    %107 = vmatprep.subr.mxu0 0.0
    %108 = vmatpush1.msra.mxu0 0.0
    %109 = vmatprep.subr.mxu0 0.0
    %110 = vmatpush1.msra.mxu0 0.0
    %111 = vmatprep.subr.mxu0 0.0
    %112 = vmatpush1.msra.mxu0 0.0
    %113 = vmatprep.subr.mxu0 0.0
    %114 = vmatpush1.msra.mxu0 0.0
    %115 = vmatprep.subr.mxu0 0.0
    %116 = vmatpush1.msra.mxu0 0.0
    %117 = vmatprep.subr.mxu0 0.0
    %118 = vmatpush1.msra.mxu0 0.0
    %119 = vmatprep.subr.mxu0 0.0
    %120 = vmatpush1.msra.mxu0 0.0
    %121 = vmatprep.subr.mxu0 0.0
    %122 = vmatpush1.msra.mxu0 0.0
    %123 = vmatprep.subr.mxu0 0.0
    %124 = vmatpush1.msra.mxu0 0.0
    %125 = vmatprep.subr.mxu0 0.0
    %126 = vmatpush1.msra.mxu0 0.0
    %127 = vmatprep.subr.mxu0 0.0
    %128 = vmatpush1.msra.mxu0 0.0
    %129 = vmatprep.mubr.f32.mxu0 0.0
    %v130 = vand.u32 %v62, 4294901760
    %v131 = vsub.f32 %v62, %v130
    %v132 = vand.u32 %v131, 4294901760
    %v133 = vsub.f32 %v131, %v132
    %v134 = vand.u32 %v133, 4294901760
    %135 = vmatmul.mubr.f32.gmra.mrb[0].mxu0 %v134
    %v136 = vpop.f32.mrb[0].mxu0
    %v137 = vadd.f32 0.0, %v136
    %v138 = vpop.f32.mrb[0].mxu0
    %139 = vdwg.mxu0
    %140 = vmatprep.subr.mxu0 0.0
    %v141 = vand.u32 %v35, 4294901760
    %v142 = vsub.f32 %v35, %v141
    %v143 = vand.u32 %v142, 4294901760
    %v144 = vsub.f32 %v142, %v143
    %v145 = vand.u32 %v144, 4294901760
    %146 = vmatpush1.msra.mxu0 %v145
    %147 = vmatprep.subr.mxu0 0.0
    %148 = vmatpush1.msra.mxu0 0.0
    %149 = vmatprep.subr.mxu0 0.0
    %150 = vmatpush1.msra.mxu0 0.0
    %151 = vmatprep.subr.mxu0 0.0
    %152 = vmatpush1.msra.mxu0 0.0
    %153 = vmatprep.subr.mxu0 0.0
    %154 = vmatpush1.msra.mxu0 0.0
    %155 = vmatprep.subr.mxu0 0.0
    %156 = vmatpush1.msra.mxu0 0.0
    %157 = vmatprep.subr.mxu0 0.0
    %158 = vmatpush1.msra.mxu0 0.0
    %159 = vmatprep.subr.mxu0 0.0
    %160 = vmatpush1.msra.mxu0 0.0
    %161 = vmatprep.subr.mxu0 0.0
    %162 = vmatpush1.msra.mxu0 0.0
    %163 = vmatprep.subr.mxu0 0.0
    %164 = vmatpush1.msra.mxu0 0.0
    %165 = vmatprep.subr.mxu0 0.0
    %166 = vmatpush1.msra.mxu0 0.0
    %167 = vmatprep.subr.mxu0 0.0
    %168 = vmatpush1.msra.mxu0 0.0
    %169 = vmatprep.subr.mxu0 0.0
    %170 = vmatpush1.msra.mxu0 0.0
    %171 = vmatprep.subr.mxu0 0.0
    %172 = vmatpush1.msra.mxu0 0.0
    %173 = vmatprep.subr.mxu0 0.0
    %174 = vmatpush1.msra.mxu0 0.0
    %175 = vmatprep.subr.mxu0 0.0
    %176 = vmatpush1.msra.mxu0 0.0
    %177 = vmatprep.subr.mxu0 0.0
    %178 = vmatpush1.msra.mxu0 0.0
    %179 = vmatprep.subr.mxu0 0.0
    %180 = vmatpush1.msra.mxu0 0.0
    %181 = vmatprep.subr.mxu0 0.0
    %182 = vmatpush1.msra.mxu0 0.0
    %183 = vmatprep.subr.mxu0 0.0
    %184 = vmatpush1.msra.mxu0 0.0
    %185 = vmatprep.subr.mxu0 0.0
    %186 = vmatpush1.msra.mxu0 0.0
    %187 = vmatprep.subr.mxu0 0.0
    %188 = vmatpush1.msra.mxu0 0.0
    %189 = vmatprep.subr.mxu0 0.0
    %190 = vmatpush1.msra.mxu0 0.0
    %191 = vmatprep.subr.mxu0 0.0
    %192 = vmatpush1.msra.mxu0 0.0
    %193 = vmatprep.subr.mxu0 0.0
    %194 = vmatpush1.msra.mxu0 0.0
    %195 = vmatprep.subr.mxu0 0.0
    %196 = vmatpush1.msra.mxu0 0.0
    %197 = vmatprep.subr.mxu0 0.0
    %198 = vmatpush1.msra.mxu0 0.0
    %199 = vmatprep.subr.mxu0 0.0
    %200 = vmatpush1.msra.mxu0 0.0
    %201 = vmatprep.subr.mxu0 0.0
    %202 = vmatpush1.msra.mxu0 0.0
    %203 = vmatprep.subr.mxu0 0.0
    %204 = vmatpush1.msra.mxu0 0.0
    %205 = vmatprep.subr.mxu0 0.0
    %206 = vmatpush1.msra.mxu0 0.0
    %207 = vmatprep.subr.mxu0 0.0
    %208 = vmatpush1.msra.mxu0 0.0
    %209 = vmatprep.mubr.f32.mxu0 0.0
    %v210 = vand.u32 %v62, 4294901760
    %211 = vmatmul.mubr.f32.gmra.mrb[0].mxu0 %v210
    %v212 = vpop.f32.mrb[0].mxu0
    %v213 = vadd.f32 %v137, %v212
    %v214 = vpop.f32.mrb[0].mxu0
    %215 = vdwg.mxu0
    %216 = vmatprep.subr.mxu0 0.0
    %v217 = vand.u32 %v35, 4294901760
    %v218 = vsub.f32 %v35, %v217
    %219 = vmatpush1.msra.mxu0 %v218
    %220 = vmatprep.subr.mxu0 0.0
    %221 = vmatpush1.msra.mxu0 0.0
    %222 = vmatprep.subr.mxu0 0.0
    %223 = vmatpush1.msra.mxu0 0.0
    %224 = vmatprep.subr.mxu0 0.0
    %225 = vmatpush1.msra.mxu0 0.0
    %226 = vmatprep.subr.mxu0 0.0
    %227 = vmatpush1.msra.mxu0 0.0
    %228 = vmatprep.subr.mxu0 0.0
    %229 = vmatpush1.msra.mxu0 0.0
    %230 = vmatprep.subr.mxu0 0.0
    %231 = vmatpush1.msra.mxu0 0.0
    %232 = vmatprep.subr.mxu0 0.0
    %233 = vmatpush1.msra.mxu0 0.0
    %234 = vmatprep.subr.mxu0 0.0
    %235 = vmatpush1.msra.mxu0 0.0
    %236 = vmatprep.subr.mxu0 0.0
    %237 = vmatpush1.msra.mxu0 0.0
    %238 = vmatprep.subr.mxu0 0.0
    %239 = vmatpush1.msra.mxu0 0.0
    %240 = vmatprep.subr.mxu0 0.0
    %241 = vmatpush1.msra.mxu0 0.0
    %242 = vmatprep.subr.mxu0 0.0
    %243 = vmatpush1.msra.mxu0 0.0
    %244 = vmatprep.subr.mxu0 0.0
    %245 = vmatpush1.msra.mxu0 0.0
    %246 = vmatprep.subr.mxu0 0.0
    %247 = vmatpush1.msra.mxu0 0.0
    %248 = vmatprep.subr.mxu0 0.0
    %249 = vmatpush1.msra.mxu0 0.0
    %250 = vmatprep.subr.mxu0 0.0
    %251 = vmatpush1.msra.mxu0 0.0
    %252 = vmatprep.subr.mxu0 0.0
    %253 = vmatpush1.msra.mxu0 0.0
    %254 = vmatprep.subr.mxu0 0.0
    %255 = vmatpush1.msra.mxu0 0.0
    %256 = vmatprep.subr.mxu0 0.0
    %257 = vmatpush1.msra.mxu0 0.0
    %258 = vmatprep.subr.mxu0 0.0
    %259 = vmatpush1.msra.mxu0 0.0
    %260 = vmatprep.subr.mxu0 0.0
    %261 = vmatpush1.msra.mxu0 0.0
    %262 = vmatprep.subr.mxu0 0.0
    %263 = vmatpush1.msra.mxu0 0.0
    %264 = vmatprep.subr.mxu0 0.0
    %265 = vmatpush1.msra.mxu0 0.0
    %266 = vmatprep.subr.mxu0 0.0
    %267 = vmatpush1.msra.mxu0 0.0
    %268 = vmatprep.subr.mxu0 0.0
    %269 = vmatpush1.msra.mxu0 0.0
    %270 = vmatprep.subr.mxu0 0.0
    %271 = vmatpush1.msra.mxu0 0.0
    %272 = vmatprep.subr.mxu0 0.0
    %273 = vmatpush1.msra.mxu0 0.0
    %274 = vmatprep.subr.mxu0 0.0
    %275 = vmatpush1.msra.mxu0 0.0
    %276 = vmatprep.subr.mxu0 0.0
    %277 = vmatpush1.msra.mxu0 0.0
    %278 = vmatprep.subr.mxu0 0.0
    %279 = vmatpush1.msra.mxu0 0.0
    %280 = vmatprep.subr.mxu0 0.0
    %281 = vmatpush1.msra.mxu0 0.0
    %282 = vmatprep.mubr.f32.mxu0 0.0
    %v283 = vand.u32 %v62, 4294901760
    %v284 = vsub.f32 %v62, %v283
    %285 = vmatmul.mubr.f32.gmra.mrb[0].mxu0 %v284
    %v286 = vpop.f32.mrb[0].mxu0
    %v287 = vadd.f32 %v213, %v286
    %v288 = vpop.f32.mrb[0].mxu0
    %289 = vdwg.mxu0
    %290 = vmatprep.subr.mxu0 0.0
    %v291 = vand.u32 %v35, 4294901760
    %292 = vmatpush1.msra.mxu0 %v291
    %293 = vmatprep.subr.mxu0 0.0
    %294 = vmatpush1.msra.mxu0 0.0
    %295 = vmatprep.subr.mxu0 0.0
    %296 = vmatpush1.msra.mxu0 0.0
    %297 = vmatprep.subr.mxu0 0.0
    %298 = vmatpush1.msra.mxu0 0.0
    %299 = vmatprep.subr.mxu0 0.0
    %300 = vmatpush1.msra.mxu0 0.0
    %301 = vmatprep.subr.mxu0 0.0
    %302 = vmatpush1.msra.mxu0 0.0
    %303 = vmatprep.subr.mxu0 0.0
    %304 = vmatpush1.msra.mxu0 0.0
    %305 = vmatprep.subr.mxu0 0.0
    %306 = vmatpush1.msra.mxu0 0.0
    %307 = vmatprep.subr.mxu0 0.0
    %308 = vmatpush1.msra.mxu0 0.0
    %309 = vmatprep.subr.mxu0 0.0
    %310 = vmatpush1.msra.mxu0 0.0
    %311 = vmatprep.subr.mxu0 0.0
    %312 = vmatpush1.msra.mxu0 0.0
    %313 = vmatprep.subr.mxu0 0.0
    %314 = vmatpush1.msra.mxu0 0.0
    %315 = vmatprep.subr.mxu0 0.0
    %316 = vmatpush1.msra.mxu0 0.0
    %317 = vmatprep.subr.mxu0 0.0
    %318 = vmatpush1.msra.mxu0 0.0
    %319 = vmatprep.subr.mxu0 0.0
    %320 = vmatpush1.msra.mxu0 0.0
    %321 = vmatprep.subr.mxu0 0.0
    %322 = vmatpush1.msra.mxu0 0.0
    %323 = vmatprep.subr.mxu0 0.0
    %324 = vmatpush1.msra.mxu0 0.0
    %325 = vmatprep.subr.mxu0 0.0
    %326 = vmatpush1.msra.mxu0 0.0
    %327 = vmatprep.subr.mxu0 0.0
    %328 = vmatpush1.msra.mxu0 0.0
    %329 = vmatprep.subr.mxu0 0.0
    %330 = vmatpush1.msra.mxu0 0.0
    %331 = vmatprep.subr.mxu0 0.0
    %332 = vmatpush1.msra.mxu0 0.0
    %333 = vmatprep.subr.mxu0 0.0
    %334 = vmatpush1.msra.mxu0 0.0
    %335 = vmatprep.subr.mxu0 0.0
    %336 = vmatpush1.msra.mxu0 0.0
    %337 = vmatprep.subr.mxu0 0.0
    %338 = vmatpush1.msra.mxu0 0.0
    %339 = vmatprep.subr.mxu0 0.0
    %340 = vmatpush1.msra.mxu0 0.0
    %341 = vmatprep.subr.mxu0 0.0
    %342 = vmatpush1.msra.mxu0 0.0
    %343 = vmatprep.subr.mxu0 0.0
    %344 = vmatpush1.msra.mxu0 0.0
    %345 = vmatprep.subr.mxu0 0.0
    %346 = vmatpush1.msra.mxu0 0.0
    %347 = vmatprep.subr.mxu0 0.0
    %348 = vmatpush1.msra.mxu0 0.0
    %349 = vmatprep.subr.mxu0 0.0
    %350 = vmatpush1.msra.mxu0 0.0
    %351 = vmatprep.subr.mxu0 0.0
    %352 = vmatpush1.msra.mxu0 0.0
    %353 = vmatprep.subr.mxu0 0.0
    %354 = vmatpush1.msra.mxu0 0.0
    %355 = vmatprep.mubr.f32.mxu0 0.0
    %v356 = vand.u32 %v62, 4294901760
    %v357 = vsub.f32 %v62, %v356
    %v358 = vand.u32 %v357, 4294901760
    %359 = vmatmul.mubr.f32.gmra.mrb[0].mxu0 %v358
    %v360 = vpop.f32.mrb[0].mxu0
    %v361 = vadd.f32 %v287, %v360
    %v362 = vpop.f32.mrb[0].mxu0
    %363 = vdwg.mxu0
    %364 = vmatprep.subr.mxu0 0.0
    %v365 = vand.u32 %v35, 4294901760
    %v366 = vsub.f32 %v35, %v365
    %v367 = vand.u32 %v366, 4294901760
    %368 = vmatpush1.msra.mxu0 %v367
    %369 = vmatprep.subr.mxu0 0.0
    %370 = vmatpush1.msra.mxu0 0.0
    %371 = vmatprep.subr.mxu0 0.0
    %372 = vmatpush1.msra.mxu0 0.0
    %373 = vmatprep.subr.mxu0 0.0
    %374 = vmatpush1.msra.mxu0 0.0
    %375 = vmatprep.subr.mxu0 0.0
    %376 = vmatpush1.msra.mxu0 0.0
    %377 = vmatprep.subr.mxu0 0.0
    %378 = vmatpush1.msra.mxu0 0.0
    %379 = vmatprep.subr.mxu0 0.0
    %380 = vmatpush1.msra.mxu0 0.0
    %381 = vmatprep.subr.mxu0 0.0
    %382 = vmatpush1.msra.mxu0 0.0
    %383 = vmatprep.subr.mxu0 0.0
    %384 = vmatpush1.msra.mxu0 0.0
    %385 = vmatprep.subr.mxu0 0.0
    %386 = vmatpush1.msra.mxu0 0.0
    %387 = vmatprep.subr.mxu0 0.0
    %388 = vmatpush1.msra.mxu0 0.0
    %389 = vmatprep.subr.mxu0 0.0
    %390 = vmatpush1.msra.mxu0 0.0
    %391 = vmatprep.subr.mxu0 0.0
    %392 = vmatpush1.msra.mxu0 0.0
    %393 = vmatprep.subr.mxu0 0.0
    %394 = vmatpush1.msra.mxu0 0.0
    %395 = vmatprep.subr.mxu0 0.0
    %396 = vmatpush1.msra.mxu0 0.0
    %397 = vmatprep.subr.mxu0 0.0
    %398 = vmatpush1.msra.mxu0 0.0
    %399 = vmatprep.subr.mxu0 0.0
    %400 = vmatpush1.msra.mxu0 0.0
    %401 = vmatprep.subr.mxu0 0.0
    %402 = vmatpush1.msra.mxu0 0.0
    %403 = vmatprep.subr.mxu0 0.0
    %404 = vmatpush1.msra.mxu0 0.0
    %405 = vmatprep.subr.mxu0 0.0
    %406 = vmatpush1.msra.mxu0 0.0
    %407 = vmatprep.subr.mxu0 0.0
    %408 = vmatpush1.msra.mxu0 0.0
    %409 = vmatprep.subr.mxu0 0.0
    %410 = vmatpush1.msra.mxu0 0.0
    %411 = vmatprep.subr.mxu0 0.0
    %412 = vmatpush1.msra.mxu0 0.0
    %413 = vmatprep.subr.mxu0 0.0
    %414 = vmatpush1.msra.mxu0 0.0
    %415 = vmatprep.subr.mxu0 0.0
    %416 = vmatpush1.msra.mxu0 0.0
    %417 = vmatprep.subr.mxu0 0.0
    %418 = vmatpush1.msra.mxu0 0.0
    %419 = vmatprep.subr.mxu0 0.0
    %420 = vmatpush1.msra.mxu0 0.0
    %421 = vmatprep.subr.mxu0 0.0
    %422 = vmatpush1.msra.mxu0 0.0
    %423 = vmatprep.subr.mxu0 0.0
    %424 = vmatpush1.msra.mxu0 0.0
    %425 = vmatprep.subr.mxu0 0.0
    %426 = vmatpush1.msra.mxu0 0.0
    %427 = vmatprep.subr.mxu0 0.0
    %428 = vmatpush1.msra.mxu0 0.0
    %429 = vmatprep.subr.mxu0 0.0
    %430 = vmatpush1.msra.mxu0 0.0
    %431 = vmatprep.mubr.f32.mxu0 0.0
    %v432 = vand.u32 %v62, 4294901760
    %433 = vmatmul.mubr.f32.gmra.mrb[0].mxu0 %v432
    %v434 = vpop.f32.mrb[0].mxu0
    %v435 = vadd.f32 %v361, %v434
    %v436 = vpop.f32.mrb[0].mxu0
    %437 = vdwg.mxu0
    %438 = vmatprep.subr.mxu0 0.0
    %v439 = vand.u32 %v35, 4294901760
    %440 = vmatpush1.msra.mxu0 %v439
    %441 = vmatprep.subr.mxu0 0.0
    %442 = vmatpush1.msra.mxu0 0.0
    %443 = vmatprep.subr.mxu0 0.0
    %444 = vmatpush1.msra.mxu0 0.0
    %445 = vmatprep.subr.mxu0 0.0
    %446 = vmatpush1.msra.mxu0 0.0
    %447 = vmatprep.subr.mxu0 0.0
    %448 = vmatpush1.msra.mxu0 0.0
    %449 = vmatprep.subr.mxu0 0.0
    %450 = vmatpush1.msra.mxu0 0.0
    %451 = vmatprep.subr.mxu0 0.0
    %452 = vmatpush1.msra.mxu0 0.0
    %453 = vmatprep.subr.mxu0 0.0
    %454 = vmatpush1.msra.mxu0 0.0
    %455 = vmatprep.subr.mxu0 0.0
    %456 = vmatpush1.msra.mxu0 0.0
    %457 = vmatprep.subr.mxu0 0.0
    %458 = vmatpush1.msra.mxu0 0.0
    %459 = vmatprep.subr.mxu0 0.0
    %460 = vmatpush1.msra.mxu0 0.0
    %461 = vmatprep.subr.mxu0 0.0
    %462 = vmatpush1.msra.mxu0 0.0
    %463 = vmatprep.subr.mxu0 0.0
    %464 = vmatpush1.msra.mxu0 0.0
    %465 = vmatprep.subr.mxu0 0.0
    %466 = vmatpush1.msra.mxu0 0.0
    %467 = vmatprep.subr.mxu0 0.0
    %468 = vmatpush1.msra.mxu0 0.0
    %469 = vmatprep.subr.mxu0 0.0
    %470 = vmatpush1.msra.mxu0 0.0
    %471 = vmatprep.subr.mxu0 0.0
    %472 = vmatpush1.msra.mxu0 0.0
    %473 = vmatprep.subr.mxu0 0.0
    %474 = vmatpush1.msra.mxu0 0.0
    %475 = vmatprep.subr.mxu0 0.0
    %476 = vmatpush1.msra.mxu0 0.0
    %477 = vmatprep.subr.mxu0 0.0
    %478 = vmatpush1.msra.mxu0 0.0
    %479 = vmatprep.subr.mxu0 0.0
    %480 = vmatpush1.msra.mxu0 0.0
    %481 = vmatprep.subr.mxu0 0.0
    %482 = vmatpush1.msra.mxu0 0.0
    %483 = vmatprep.subr.mxu0 0.0
    %484 = vmatpush1.msra.mxu0 0.0
    %485 = vmatprep.subr.mxu0 0.0
    %486 = vmatpush1.msra.mxu0 0.0
    %487 = vmatprep.subr.mxu0 0.0
    %488 = vmatpush1.msra.mxu0 0.0
    %489 = vmatprep.subr.mxu0 0.0
    %490 = vmatpush1.msra.mxu0 0.0
    %491 = vmatprep.subr.mxu0 0.0
    %492 = vmatpush1.msra.mxu0 0.0
    %493 = vmatprep.subr.mxu0 0.0
    %494 = vmatpush1.msra.mxu0 0.0
    %495 = vmatprep.subr.mxu0 0.0
    %496 = vmatpush1.msra.mxu0 0.0
    %497 = vmatprep.subr.mxu0 0.0
    %498 = vmatpush1.msra.mxu0 0.0
    %499 = vmatprep.subr.mxu0 0.0
    %500 = vmatpush1.msra.mxu0 0.0
    %501 = vmatprep.subr.mxu0 0.0
    %502 = vmatpush1.msra.mxu0 0.0
    %503 = vmatprep.mubr.f32.mxu0 0.0
    %v504 = vand.u32 %v62, 4294901760
    %505 = vmatmul.mubr.f32.gmra.mrb[0].mxu0 %v504
    %v506 = vpop.f32.mrb[0].mxu0
    %v507 = vadd.f32 %v435, %v506
    %v508 = vpop.f32.mrb[0].mxu0
    %509 = vdwg.mxu0
    %v510 = vsel %vm61, %v60, 0
    %512 = vmatprep.subr.mxu0 0.0
    %v513 = vand.u32 %v36, 4294901760
    %514 = vmatpush1.msra.mxu0 %v513
    %515 = vmatprep.subr.mxu0 0.0
    %516 = vmatpush1.msra.mxu0 0.0
    %517 = vmatprep.subr.mxu0 0.0
    %518 = vmatpush1.msra.mxu0 0.0
    %519 = vmatprep.subr.mxu0 0.0
    %520 = vmatpush1.msra.mxu0 0.0
    %521 = vmatprep.subr.mxu0 0.0
    %522 = vmatpush1.msra.mxu0 0.0
    %523 = vmatprep.subr.mxu0 0.0
    %524 = vmatpush1.msra.mxu0 0.0
    %525 = vmatprep.subr.mxu0 0.0
    %526 = vmatpush1.msra.mxu0 0.0
    %527 = vmatprep.subr.mxu0 0.0
    %528 = vmatpush1.msra.mxu0 0.0
    %529 = vmatprep.subr.mxu0 0.0
    %530 = vmatpush1.msra.mxu0 0.0
    %531 = vmatprep.subr.mxu0 0.0
    %532 = vmatpush1.msra.mxu0 0.0
    %533 = vmatprep.subr.mxu0 0.0
    %534 = vmatpush1.msra.mxu0 0.0
    %535 = vmatprep.subr.mxu0 0.0
    %536 = vmatpush1.msra.mxu0 0.0
    %537 = vmatprep.subr.mxu0 0.0
    %538 = vmatpush1.msra.mxu0 0.0
    %539 = vmatprep.subr.mxu0 0.0
    %540 = vmatpush1.msra.mxu0 0.0
    %541 = vmatprep.subr.mxu0 0.0
    %542 = vmatpush1.msra.mxu0 0.0
    %543 = vmatprep.subr.mxu0 0.0
    %544 = vmatpush1.msra.mxu0 0.0
    %545 = vmatprep.subr.mxu0 0.0
    %546 = vmatpush1.msra.mxu0 0.0
    %547 = vmatprep.subr.mxu0 0.0
    %548 = vmatpush1.msra.mxu0 0.0
    %549 = vmatprep.subr.mxu0 0.0
    %550 = vmatpush1.msra.mxu0 0.0
    %551 = vmatprep.subr.mxu0 0.0
    %552 = vmatpush1.msra.mxu0 0.0
    %553 = vmatprep.subr.mxu0 0.0
    %554 = vmatpush1.msra.mxu0 0.0
    %555 = vmatprep.subr.mxu0 0.0
    %556 = vmatpush1.msra.mxu0 0.0
    %557 = vmatprep.subr.mxu0 0.0
    %558 = vmatpush1.msra.mxu0 0.0
    %559 = vmatprep.subr.mxu0 0.0
    %560 = vmatpush1.msra.mxu0 0.0
    %561 = vmatprep.subr.mxu0 0.0
    %562 = vmatpush1.msra.mxu0 0.0
    %563 = vmatprep.subr.mxu0 0.0
    %564 = vmatpush1.msra.mxu0 0.0
    %565 = vmatprep.subr.mxu0 0.0
    %566 = vmatpush1.msra.mxu0 0.0
    %567 = vmatprep.subr.mxu0 0.0
    %568 = vmatpush1.msra.mxu0 0.0
    %569 = vmatprep.subr.mxu0 0.0
    %570 = vmatpush1.msra.mxu0 0.0
    %571 = vmatprep.subr.mxu0 0.0
    %572 = vmatpush1.msra.mxu0 0.0
    %573 = vmatprep.subr.mxu0 0.0
    %574 = vmatpush1.msra.mxu0 0.0
    %575 = vmatprep.subr.mxu0 0.0
    %576 = vmatpush1.msra.mxu0 0.0
    %577 = vmatprep.mubr.f32.mxu0 0.0
    %v578 = vand.u32 %v510, 4294901760
    %v579 = vsub.f32 %v510, %v578
    %v580 = vand.u32 %v579, 4294901760
    %v581 = vsub.f32 %v579, %v580
    %v582 = vand.u32 %v581, 4294901760
    %583 = vmatmul.mubr.f32.gmra.mrb[0].mxu0 %v582
    %v584 = vpop.f32.mrb[0].mxu0
    %v585 = vadd.f32 0.0, %v584
    %v586 = vpop.f32.mrb[0].mxu0
    %587 = vdwg.mxu0
    %588 = vmatprep.subr.mxu0 0.0
    %v589 = vand.u32 %v36, 4294901760
    %v590 = vsub.f32 %v36, %v589
    %v591 = vand.u32 %v590, 4294901760
    %v592 = vsub.f32 %v590, %v591
    %v593 = vand.u32 %v592, 4294901760
    %594 = vmatpush1.msra.mxu0 %v593
    %595 = vmatprep.subr.mxu0 0.0
    %596 = vmatpush1.msra.mxu0 0.0
    %597 = vmatprep.subr.mxu0 0.0
    %598 = vmatpush1.msra.mxu0 0.0
    %599 = vmatprep.subr.mxu0 0.0
    %600 = vmatpush1.msra.mxu0 0.0
    %601 = vmatprep.subr.mxu0 0.0
    %602 = vmatpush1.msra.mxu0 0.0
    %603 = vmatprep.subr.mxu0 0.0
    %604 = vmatpush1.msra.mxu0 0.0
    %605 = vmatprep.subr.mxu0 0.0
    %606 = vmatpush1.msra.mxu0 0.0
    %607 = vmatprep.subr.mxu0 0.0
    %608 = vmatpush1.msra.mxu0 0.0
    %609 = vmatprep.subr.mxu0 0.0
    %610 = vmatpush1.msra.mxu0 0.0
    %611 = vmatprep.subr.mxu0 0.0
    %612 = vmatpush1.msra.mxu0 0.0
    %613 = vmatprep.subr.mxu0 0.0
    %614 = vmatpush1.msra.mxu0 0.0
    %615 = vmatprep.subr.mxu0 0.0
    %616 = vmatpush1.msra.mxu0 0.0
    %617 = vmatprep.subr.mxu0 0.0
    %618 = vmatpush1.msra.mxu0 0.0
    %619 = vmatprep.subr.mxu0 0.0
    %620 = vmatpush1.msra.mxu0 0.0
    %621 = vmatprep.subr.mxu0 0.0
    %622 = vmatpush1.msra.mxu0 0.0
    %623 = vmatprep.subr.mxu0 0.0
    %624 = vmatpush1.msra.mxu0 0.0
    %625 = vmatprep.subr.mxu0 0.0
    %626 = vmatpush1.msra.mxu0 0.0
    %627 = vmatprep.subr.mxu0 0.0
    %628 = vmatpush1.msra.mxu0 0.0
    %629 = vmatprep.subr.mxu0 0.0
    %630 = vmatpush1.msra.mxu0 0.0
    %631 = vmatprep.subr.mxu0 0.0
    %632 = vmatpush1.msra.mxu0 0.0
    %633 = vmatprep.subr.mxu0 0.0
    %634 = vmatpush1.msra.mxu0 0.0
    %635 = vmatprep.subr.mxu0 0.0
    %636 = vmatpush1.msra.mxu0 0.0
    %637 = vmatprep.subr.mxu0 0.0
    %638 = vmatpush1.msra.mxu0 0.0
    %639 = vmatprep.subr.mxu0 0.0
    %640 = vmatpush1.msra.mxu0 0.0
    %641 = vmatprep.subr.mxu0 0.0
    %642 = vmatpush1.msra.mxu0 0.0
    %643 = vmatprep.subr.mxu0 0.0
    %644 = vmatpush1.msra.mxu0 0.0
    %645 = vmatprep.subr.mxu0 0.0
    %646 = vmatpush1.msra.mxu0 0.0
    %647 = vmatprep.subr.mxu0 0.0
    %648 = vmatpush1.msra.mxu0 0.0
    %649 = vmatprep.subr.mxu0 0.0
    %650 = vmatpush1.msra.mxu0 0.0
    %651 = vmatprep.subr.mxu0 0.0
    %652 = vmatpush1.msra.mxu0 0.0
    %653 = vmatprep.subr.mxu0 0.0
    %654 = vmatpush1.msra.mxu0 0.0
    %655 = vmatprep.subr.mxu0 0.0
    %656 = vmatpush1.msra.mxu0 0.0
    %657 = vmatprep.mubr.f32.mxu0 0.0
    %v658 = vand.u32 %v510, 4294901760
    %659 = vmatmul.mubr.f32.gmra.mrb[0].mxu0 %v658
    %v660 = vpop.f32.mrb[0].mxu0
    %v661 = vadd.f32 %v585, %v660
    %v662 = vpop.f32.mrb[0].mxu0
    %663 = vdwg.mxu0
    %664 = vmatprep.subr.mxu0 0.0
    %v665 = vand.u32 %v36, 4294901760
    %v666 = vsub.f32 %v36, %v665
    %667 = vmatpush1.msra.mxu0 %v666
    %668 = vmatprep.subr.mxu0 0.0
    %669 = vmatpush1.msra.mxu0 0.0
    %670 = vmatprep.subr.mxu0 0.0
    %671 = vmatpush1.msra.mxu0 0.0
    %672 = vmatprep.subr.mxu0 0.0
    %673 = vmatpush1.msra.mxu0 0.0
    %674 = vmatprep.subr.mxu0 0.0
    %675 = vmatpush1.msra.mxu0 0.0
    %676 = vmatprep.subr.mxu0 0.0
    %677 = vmatpush1.msra.mxu0 0.0
    %678 = vmatprep.subr.mxu0 0.0
    %679 = vmatpush1.msra.mxu0 0.0
    %680 = vmatprep.subr.mxu0 0.0
    %681 = vmatpush1.msra.mxu0 0.0
    %682 = vmatprep.subr.mxu0 0.0
    %683 = vmatpush1.msra.mxu0 0.0
    %684 = vmatprep.subr.mxu0 0.0
    %685 = vmatpush1.msra.mxu0 0.0
    %686 = vmatprep.subr.mxu0 0.0
    %687 = vmatpush1.msra.mxu0 0.0
    %688 = vmatprep.subr.mxu0 0.0
    %689 = vmatpush1.msra.mxu0 0.0
    %690 = vmatprep.subr.mxu0 0.0
    %691 = vmatpush1.msra.mxu0 0.0
    %692 = vmatprep.subr.mxu0 0.0
    %693 = vmatpush1.msra.mxu0 0.0
    %694 = vmatprep.subr.mxu0 0.0
    %695 = vmatpush1.msra.mxu0 0.0
    %696 = vmatprep.subr.mxu0 0.0
    %697 = vmatpush1.msra.mxu0 0.0
    %698 = vmatprep.subr.mxu0 0.0
    %699 = vmatpush1.msra.mxu0 0.0
    %700 = vmatprep.subr.mxu0 0.0
    %701 = vmatpush1.msra.mxu0 0.0
    %702 = vmatprep.subr.mxu0 0.0
    %703 = vmatpush1.msra.mxu0 0.0
    %704 = vmatprep.subr.mxu0 0.0
    %705 = vmatpush1.msra.mxu0 0.0
    %706 = vmatprep.subr.mxu0 0.0
    %707 = vmatpush1.msra.mxu0 0.0
    %708 = vmatprep.subr.mxu0 0.0
    %709 = vmatpush1.msra.mxu0 0.0
    %710 = vmatprep.subr.mxu0 0.0
    %711 = vmatpush1.msra.mxu0 0.0
    %712 = vmatprep.subr.mxu0 0.0
    %713 = vmatpush1.msra.mxu0 0.0
    %714 = vmatprep.subr.mxu0 0.0
    %715 = vmatpush1.msra.mxu0 0.0
    %716 = vmatprep.subr.mxu0 0.0
    %717 = vmatpush1.msra.mxu0 0.0
    %718 = vmatprep.subr.mxu0 0.0
    %719 = vmatpush1.msra.mxu0 0.0
    %720 = vmatprep.subr.mxu0 0.0
    %721 = vmatpush1.msra.mxu0 0.0
    %722 = vmatprep.subr.mxu0 0.0
    %723 = vmatpush1.msra.mxu0 0.0
    %724 = vmatprep.subr.mxu0 0.0
    %725 = vmatpush1.msra.mxu0 0.0
    %726 = vmatprep.subr.mxu0 0.0
    %727 = vmatpush1.msra.mxu0 0.0
    %728 = vmatprep.subr.mxu0 0.0
    %729 = vmatpush1.msra.mxu0 0.0
    %730 = vmatprep.mubr.f32.mxu0 0.0
    %v731 = vand.u32 %v510, 4294901760
    %v732 = vsub.f32 %v510, %v731
    %733 = vmatmul.mubr.f32.gmra.mrb[0].mxu0 %v732
    %v734 = vpop.f32.mrb[0].mxu0
    %v735 = vadd.f32 %v661, %v734
    %v736 = vpop.f32.mrb[0].mxu0
    %737 = vdwg.mxu0
    %738 = vmatprep.subr.mxu0 0.0
    %v739 = vand.u32 %v36, 4294901760
    %740 = vmatpush1.msra.mxu0 %v739
    %741 = vmatprep.subr.mxu0 0.0
    %742 = vmatpush1.msra.mxu0 0.0
    %743 = vmatprep.subr.mxu0 0.0
    %744 = vmatpush1.msra.mxu0 0.0
    %745 = vmatprep.subr.mxu0 0.0
    %746 = vmatpush1.msra.mxu0 0.0
    %747 = vmatprep.subr.mxu0 0.0
    %748 = vmatpush1.msra.mxu0 0.0
    %749 = vmatprep.subr.mxu0 0.0
    %750 = vmatpush1.msra.mxu0 0.0
    %751 = vmatprep.subr.mxu0 0.0
    %752 = vmatpush1.msra.mxu0 0.0
    %753 = vmatprep.subr.mxu0 0.0
    %754 = vmatpush1.msra.mxu0 0.0
    %755 = vmatprep.subr.mxu0 0.0
    %756 = vmatpush1.msra.mxu0 0.0
    %757 = vmatprep.subr.mxu0 0.0
    %758 = vmatpush1.msra.mxu0 0.0
    %759 = vmatprep.subr.mxu0 0.0
    %760 = vmatpush1.msra.mxu0 0.0
    %761 = vmatprep.subr.mxu0 0.0
    %762 = vmatpush1.msra.mxu0 0.0
    %763 = vmatprep.subr.mxu0 0.0
    %764 = vmatpush1.msra.mxu0 0.0
    %765 = vmatprep.subr.mxu0 0.0
    %766 = vmatpush1.msra.mxu0 0.0
    %767 = vmatprep.subr.mxu0 0.0
    %768 = vmatpush1.msra.mxu0 0.0
    %769 = vmatprep.subr.mxu0 0.0
    %770 = vmatpush1.msra.mxu0 0.0
    %771 = vmatprep.subr.mxu0 0.0
    %772 = vmatpush1.msra.mxu0 0.0
    %773 = vmatprep.subr.mxu0 0.0
    %774 = vmatpush1.msra.mxu0 0.0
    %775 = vmatprep.subr.mxu0 0.0
    %776 = vmatpush1.msra.mxu0 0.0
    %777 = vmatprep.subr.mxu0 0.0
    %778 = vmatpush1.msra.mxu0 0.0
    %779 = vmatprep.subr.mxu0 0.0
    %780 = vmatpush1.msra.mxu0 0.0
    %781 = vmatprep.subr.mxu0 0.0
    %782 = vmatpush1.msra.mxu0 0.0
    %783 = vmatprep.subr.mxu0 0.0
    %784 = vmatpush1.msra.mxu0 0.0
    %785 = vmatprep.subr.mxu0 0.0
    %786 = vmatpush1.msra.mxu0 0.0
    %787 = vmatprep.subr.mxu0 0.0
    %788 = vmatpush1.msra.mxu0 0.0
    %789 = vmatprep.subr.mxu0 0.0
    %790 = vmatpush1.msra.mxu0 0.0
    %791 = vmatprep.subr.mxu0 0.0
    %792 = vmatpush1.msra.mxu0 0.0
    %793 = vmatprep.subr.mxu0 0.0
    %794 = vmatpush1.msra.mxu0 0.0
    %795 = vmatprep.subr.mxu0 0.0
    %796 = vmatpush1.msra.mxu0 0.0
    %797 = vmatprep.subr.mxu0 0.0
    %798 = vmatpush1.msra.mxu0 0.0
    %799 = vmatprep.subr.mxu0 0.0
    %800 = vmatpush1.msra.mxu0 0.0
    %801 = vmatprep.subr.mxu0 0.0
    %802 = vmatpush1.msra.mxu0 0.0
    %803 = vmatprep.mubr.f32.mxu0 0.0
    %v804 = vand.u32 %v510, 4294901760
    %v805 = vsub.f32 %v510, %v804
    %v806 = vand.u32 %v805, 4294901760
    %807 = vmatmul.mubr.f32.gmra.mrb[0].mxu0 %v806
    %v808 = vpop.f32.mrb[0].mxu0
    %v809 = vadd.f32 %v735, %v808
    %v810 = vpop.f32.mrb[0].mxu0
    %811 = vdwg.mxu0
    %812 = vmatprep.subr.mxu0 0.0
    %v813 = vand.u32 %v36, 4294901760
    %v814 = vsub.f32 %v36, %v813
    %v815 = vand.u32 %v814, 4294901760
    %816 = vmatpush1.msra.mxu0 %v815
    %817 = vmatprep.subr.mxu0 0.0
    %818 = vmatpush1.msra.mxu0 0.0
    %819 = vmatprep.subr.mxu0 0.0
    %820 = vmatpush1.msra.mxu0 0.0
    %821 = vmatprep.subr.mxu0 0.0
    %822 = vmatpush1.msra.mxu0 0.0
    %823 = vmatprep.subr.mxu0 0.0
    %824 = vmatpush1.msra.mxu0 0.0
    %825 = vmatprep.subr.mxu0 0.0
    %826 = vmatpush1.msra.mxu0 0.0
    %827 = vmatprep.subr.mxu0 0.0
    %828 = vmatpush1.msra.mxu0 0.0
    %829 = vmatprep.subr.mxu0 0.0
    %830 = vmatpush1.msra.mxu0 0.0
    %831 = vmatprep.subr.mxu0 0.0
    %832 = vmatpush1.msra.mxu0 0.0
    %833 = vmatprep.subr.mxu0 0.0
    %834 = vmatpush1.msra.mxu0 0.0
    %835 = vmatprep.subr.mxu0 0.0
    %836 = vmatpush1.msra.mxu0 0.0
    %837 = vmatprep.subr.mxu0 0.0
    %838 = vmatpush1.msra.mxu0 0.0
    %839 = vmatprep.subr.mxu0 0.0
    %840 = vmatpush1.msra.mxu0 0.0
    %841 = vmatprep.subr.mxu0 0.0
    %842 = vmatpush1.msra.mxu0 0.0
    %843 = vmatprep.subr.mxu0 0.0
    %844 = vmatpush1.msra.mxu0 0.0
    %845 = vmatprep.subr.mxu0 0.0
    %846 = vmatpush1.msra.mxu0 0.0
    %847 = vmatprep.subr.mxu0 0.0
    %848 = vmatpush1.msra.mxu0 0.0
    %849 = vmatprep.subr.mxu0 0.0
    %850 = vmatpush1.msra.mxu0 0.0
    %851 = vmatprep.subr.mxu0 0.0
    %852 = vmatpush1.msra.mxu0 0.0
    %853 = vmatprep.subr.mxu0 0.0
    %854 = vmatpush1.msra.mxu0 0.0
    %855 = vmatprep.subr.mxu0 0.0
    %856 = vmatpush1.msra.mxu0 0.0
    %857 = vmatprep.subr.mxu0 0.0
    %858 = vmatpush1.msra.mxu0 0.0
    %859 = vmatprep.subr.mxu0 0.0
    %860 = vmatpush1.msra.mxu0 0.0
    %861 = vmatprep.subr.mxu0 0.0
    %862 = vmatpush1.msra.mxu0 0.0
    %863 = vmatprep.subr.mxu0 0.0
    %864 = vmatpush1.msra.mxu0 0.0
    %865 = vmatprep.subr.mxu0 0.0
    %866 = vmatpush1.msra.mxu0 0.0
    %867 = vmatprep.subr.mxu0 0.0
    %868 = vmatpush1.msra.mxu0 0.0
    %869 = vmatprep.subr.mxu0 0.0
    %870 = vmatpush1.msra.mxu0 0.0
    %871 = vmatprep.subr.mxu0 0.0
    %872 = vmatpush1.msra.mxu0 0.0
    %873 = vmatprep.subr.mxu0 0.0
    %874 = vmatpush1.msra.mxu0 0.0
    %875 = vmatprep.subr.mxu0 0.0
    %876 = vmatpush1.msra.mxu0 0.0
    %877 = vmatprep.subr.mxu0 0.0
    %878 = vmatpush1.msra.mxu0 0.0
    %879 = vmatprep.mubr.f32.mxu0 0.0
    %v880 = vand.u32 %v510, 4294901760
    %881 = vmatmul.mubr.f32.gmra.mrb[0].mxu0 %v880
    %v882 = vpop.f32.mrb[0].mxu0
    %v883 = vadd.f32 %v809, %v882
    %v884 = vpop.f32.mrb[0].mxu0
    %885 = vdwg.mxu0
    %886 = vmatprep.subr.mxu0 0.0
    %v887 = vand.u32 %v36, 4294901760
    %888 = vmatpush1.msra.mxu0 %v887
    %889 = vmatprep.subr.mxu0 0.0
    %890 = vmatpush1.msra.mxu0 0.0
    %891 = vmatprep.subr.mxu0 0.0
    %892 = vmatpush1.msra.mxu0 0.0
    %893 = vmatprep.subr.mxu0 0.0
    %894 = vmatpush1.msra.mxu0 0.0
    %895 = vmatprep.subr.mxu0 0.0
    %896 = vmatpush1.msra.mxu0 0.0
    %897 = vmatprep.subr.mxu0 0.0
    %898 = vmatpush1.msra.mxu0 0.0
    %899 = vmatprep.subr.mxu0 0.0
    %900 = vmatpush1.msra.mxu0 0.0
    %901 = vmatprep.subr.mxu0 0.0
    %902 = vmatpush1.msra.mxu0 0.0
    %903 = vmatprep.subr.mxu0 0.0
    %904 = vmatpush1.msra.mxu0 0.0
    %905 = vmatprep.subr.mxu0 0.0
    %906 = vmatpush1.msra.mxu0 0.0
    %907 = vmatprep.subr.mxu0 0.0
    %908 = vmatpush1.msra.mxu0 0.0
    %909 = vmatprep.subr.mxu0 0.0
    %910 = vmatpush1.msra.mxu0 0.0
    %911 = vmatprep.subr.mxu0 0.0
    %912 = vmatpush1.msra.mxu0 0.0
    %913 = vmatprep.subr.mxu0 0.0
    %914 = vmatpush1.msra.mxu0 0.0
    %915 = vmatprep.subr.mxu0 0.0
    %916 = vmatpush1.msra.mxu0 0.0
    %917 = vmatprep.subr.mxu0 0.0
    %918 = vmatpush1.msra.mxu0 0.0
    %919 = vmatprep.subr.mxu0 0.0
    %920 = vmatpush1.msra.mxu0 0.0
    %921 = vmatprep.subr.mxu0 0.0
    %922 = vmatpush1.msra.mxu0 0.0
    %923 = vmatprep.subr.mxu0 0.0
    %924 = vmatpush1.msra.mxu0 0.0
    %925 = vmatprep.subr.mxu0 0.0
    %926 = vmatpush1.msra.mxu0 0.0
    %927 = vmatprep.subr.mxu0 0.0
    %928 = vmatpush1.msra.mxu0 0.0
    %929 = vmatprep.subr.mxu0 0.0
    %930 = vmatpush1.msra.mxu0 0.0
    %931 = vmatprep.subr.mxu0 0.0
    %932 = vmatpush1.msra.mxu0 0.0
    %933 = vmatprep.subr.mxu0 0.0
    %934 = vmatpush1.msra.mxu0 0.0
    %935 = vmatprep.subr.mxu0 0.0
    %936 = vmatpush1.msra.mxu0 0.0
    %937 = vmatprep.subr.mxu0 0.0
    %938 = vmatpush1.msra.mxu0 0.0
    %939 = vmatprep.subr.mxu0 0.0
    %940 = vmatpush1.msra.mxu0 0.0
    %941 = vmatprep.subr.mxu0 0.0
    %942 = vmatpush1.msra.mxu0 0.0
    %943 = vmatprep.subr.mxu0 0.0
    %944 = vmatpush1.msra.mxu0 0.0
    %945 = vmatprep.subr.mxu0 0.0
    %946 = vmatpush1.msra.mxu0 0.0
    %947 = vmatprep.subr.mxu0 0.0
    %948 = vmatpush1.msra.mxu0 0.0
    %949 = vmatprep.subr.mxu0 0.0
    %950 = vmatpush1.msra.mxu0 0.0
    %951 = vmatprep.mubr.f32.mxu0 0.0
    %v952 = vand.u32 %v510, 4294901760
    %953 = vmatmul.mubr.f32.gmra.mrb[0].mxu0 %v952
    %v954 = vpop.f32.mrb[0].mxu0
    %v955 = vadd.f32 %v883, %v954
    %v956 = vpop.f32.mrb[0].mxu0
    %957 = vdwg.mxu0
    %v958 = vld [vmem:[#allocation2] sm:$0x3]
    %v961 = vrot.slane %v955, 7
    %vm962 = vcmask 1041409
    %v963 = vsel %vm962, %v961, %v507
    %v965 = vadd.f32 %v958, %v963
    %vm966 = vcmask 254976
    %967 = vst.msk [vmem:[#allocation2] sm:$0x3] %vm966, %v965
    // Predicated region
    $region22: #{tpu_custom_call.1} parent=1 // pred_check
      %p968 = pneg %p29
    $region23: #{tpu_custom_call.1} parent=1 // pred_check_branch
      %970 = sbr.rel (%p968) target = $region25
    $region24: #{tpu_custom_call.1} parent=1 // pred_region
      %v971 = vld [vmem:[#allocation2] sm:$0x3]
      %v972 = vld [vmem:[%s2] sm:$0x3]
      %v973 = vadd.f32 %v972, 1e-08
      %975 = vset.pattern.permute.xlu0 0
      %976 = vperm.xlu0 %975, %v973
      %v977 = vpop.permute.xlu0 %976
      %v979 = vrcp.pop %v977
      %v980 = vmul.f32 %v971, %v979
      %981 = vst.msk [vmem:[#allocation6] sm:$0x3] %vm966, %v980
    $region25: #{tpu_custom_call.1} parent=1 // pred_fallthru
      _
    // Predicated region
    $region26: #{tpu_custom_call.1} parent=1 // pred_check
      _
    $region27: #{tpu_custom_call.1} parent=1 // pred_check_branch
      %983 = sbr.rel (0) target = $region29
    $region28: #{tpu_custom_call.1} parent=1 // pred_region
      %s985 = ssub.s32 32, 32
      %986 = vsyncadd [#allocation5], %s985
      %s988 = sshll.u32 [#allocation6], 4
      %s989 = int_to_ptr.vmem [resolvable:$true] %s988
      %991 = dma.vmem_to_hbm [thread:$0]  %s989, 32, %s3, [#allocation5]
    $region29: #{tpu_custom_call.1} parent=1 // pred_fallthru
      _
    // Predicated region
    $region30: #{tpu_custom_call.1} parent=1 // pred_check
      _
    $region31: #{tpu_custom_call.1} parent=1 // pred_check_branch
      %993 = sbr.rel (0) target = $region33
    $region32: #{tpu_custom_call.1} parent=1 // pred_region
      %994 = dma.done [#allocation5], 32
    $region33: #{tpu_custom_call.1} parent=1 // pred_fallthru
      _
    %995 = vsyncpa [#allocation4], 1
    %996 = vsyncpa [#allocation5], 1

</llo_original>
